<compile_context>
chip_gen: v6e
topology: v6e:2x2x1
jax: 0.10.0
libtpu: 0.0.40
codegen_flags: <defaults>
</compile_context>

<pallas_src>
import functools

import jax
import jax.numpy as jnp
from jax.experimental import pallas as pl
from jax.experimental.pallas import tpu as pltpu


def _round_up(x, m):
    return ((x + m - 1) // m) * m


def _patch_proj_kernel(x_ref, w_ref, b_ref, o_ref, *, compute_dtype):
    # x tile arrives at its native dtype (usually f32); cast in-kernel so the
    # wrapper never materializes a second cast/padded copy of x in HBM.
    x = x_ref[...].astype(compute_dtype)
    acc = jnp.dot(x, w_ref[...], preferred_element_type=jnp.float32)
    o_ref[...] = (acc + b_ref[...]).astype(o_ref.dtype)


@functools.partial(jax.jit,
                   static_argnames=("tile_m", "compute_dtype", "out_dtype"))
def patch_projection(x, weight_t, bias, *, tile_m=512,
                     compute_dtype=jnp.bfloat16, out_dtype=None):
    """Forward of PatchProjectionLayer.

    x:        (B, N, C, P, P)
    weight_t: (C*P*P, E)  -- transpose of the torch (E, C*P*P) weight
    bias:     (E,)
    returns:  (B, N, E) in out_dtype (defaults to x.dtype, matching torch).
    """
    b, n, c, h, w = x.shape
    d_in = c * h * w
    d_out = weight_t.shape[1]
    if out_dtype is None:
        out_dtype = x.dtype

    m = b * n
    x_flat = x.reshape(m, d_in)           # == torch .view(B, N, -1), merged B*N

    # Lane-dense output features: pad d_out up to a multiple of 128 (no-op for
    # typical embedding dims like 768/1024). Only the tiny, one-time weight and
    # bias are padded; x is never padded/copied. Padded K is unnecessary since
    # the whole contraction lives in one block, and the M remainder is handled
    # by Pallas boundary-block masking on the output store.
    d_out_p = _round_up(d_out, 128)
    w_p = weight_t.astype(compute_dtype)
    b_p = bias.astype(jnp.float32).reshape(1, d_out)
    if d_out_p != d_out:
        w_p = jnp.pad(w_p, ((0, 0), (0, d_out_p - d_out)))
        b_p = jnp.pad(b_p, ((0, 0), (0, d_out_p - d_out)))

    # M tile: as large as sensible; multiple of 16 so bf16 packed sublanes stay
    # unmasked even if x itself is fed in bf16.
    tm = min(tile_m, _round_up(m, 16))
    gm = pl.cdiv(m, tm)

    x_item = jnp.dtype(x.dtype).itemsize
    w_item = jnp.dtype(compute_dtype).itemsize
    o_item = jnp.dtype(out_dtype).itemsize
    bytes_needed = (
        2 * tm * d_in * x_item        # x tiles (double buffered)
        + 2 * d_in * d_out_p * w_item  # resident weight (counted generously)
        + 2 * d_out_p * 4              # resident bias
        + 2 * tm * d_out_p * o_item)   # output tiles (double buffered)
    vmem_limit = int(min(max(1.5 * bytes_needed + (2 << 20), 4 << 20),
                         64 << 20))

    # TODO(synk): if xprof shows exposed x DMA at tile boundaries, add
    # pipeline_mode=pl.Buffered(3) on the x BlockSpec.
    out = pl.pallas_call(
        functools.partial(_patch_proj_kernel, compute_dtype=compute_dtype),
        out_shape=jax.ShapeDtypeStruct((m, d_out_p), out_dtype),
        grid_spec=pltpu.PrefetchScalarGridSpec(
            num_scalar_prefetch=0,
            grid=(gm,),
            in_specs=[
                pl.BlockSpec((tm, d_in), lambda i: (i, 0)),        # x rows
                pl.BlockSpec((d_in, d_out_p), lambda i: (0, 0)),   # resident W
                pl.BlockSpec((1, d_out_p), lambda i: (0, 0)),      # resident b
            ],
            out_specs=pl.BlockSpec((tm, d_out_p), lambda i: (i, 0)),
        ),
        compiler_params=pltpu.CompilerParams(
            dimension_semantics=("parallel",),
            vmem_limit_bytes=vmem_limit),
    )(x_flat, w_p, b_p)

    if d_out_p != d_out:
        out = out[:, :d_out]
    return out.reshape(b, n, d_out)


if __name__ == "__main__":
    # Small shapes consistent with the module's forward.
    batch = 2
    num_patches = 8
    num_channels = 4
    patch_size = 4
    embedding_dim = 32
    d_in = patch_size * patch_size * num_channels  # 64

    key = jax.random.PRNGKey(0)
    kx, kw, kb = jax.random.split(key, 3)

    x = jax.random.normal(
        kx, (batch, num_patches, num_channels, patch_size, patch_size),
        dtype=jnp.float32)

    # Deterministic init mirroring torch.nn.Linear: U(-1/sqrt(d_in), 1/sqrt(d_in)).
    limit = 1.0 / jnp.sqrt(jnp.float32(d_in))
    # PyTorch weight is (out, in); we store the transpose (in, out) for the kernel.
    weight = jax.random.uniform(kw, (embedding_dim, d_in),
                                minval=-limit, maxval=limit, dtype=jnp.float32)
    bias = jax.random.uniform(kb, (embedding_dim,),
                              minval=-limit, maxval=limit, dtype=jnp.float32)
    weight_t = weight.T

    out = patch_projection(x, weight_t, bias)
    jax.block_until_ready(out)

    # Pure-JAX f32 reference check (bf16 MXU operands -> looser tolerance).
    ref = x.reshape(batch, num_patches, -1) @ weight_t + bias
    assert out.shape == (batch, num_patches, embedding_dim)
    assert out.dtype == x.dtype
    assert jnp.allclose(out, ref, atol=3e-2, rtol=3e-2)

    print("KERNEL_OK")
</pallas_src>

<mosaic_0001>
module attributes {stable_mosaic.version = 11 : i64} {
  func.func @_patch_proj_kernel(%arg0: i32, %arg1: memref<16x64xf32, #tpu.memory_space<vmem>>, %arg2: memref<64x128xbf16, #tpu.memory_space<vmem>>, %arg3: memref<1x128xf32, #tpu.memory_space<vmem>>, %arg4: memref<16x128xf32, #tpu.memory_space<vmem>>) attributes {dimension_semantics = [#tpu.dimension_semantics<parallel>], iteration_bounds = array<i64: 1>, scalar_prefetch = 0 : i64, scratch_operands = 0 : i64, tpu.core_type = #tpu.core_type<tc>, window_params = [{transform_indices = @transform_0, window_bounds = array<i64: 16, 64>}, {pipeline_mode = #tpu.pipeline_mode<synchronous>, transform_indices = @transform_1, window_bounds = array<i64: 64, 128>}, {pipeline_mode = #tpu.pipeline_mode<synchronous>, transform_indices = @transform_2, window_bounds = array<i64: 1, 128>}, {transform_indices = @transform_3, window_bounds = array<i64: 16, 128>}]} {
    %c0 = arith.constant 0 : index
    %c0_0 = arith.constant 0 : index
    %0 = vector.load %arg1[%c0, %c0_0] : memref<16x64xf32, #tpu.memory_space<vmem>>, vector<16x64xf32>
    %1 = arith.truncf %0 : vector<16x64xf32> to vector<16x64xbf16>
    %c0_1 = arith.constant 0 : index
    %c0_2 = arith.constant 0 : index
    %2 = vector.load %arg2[%c0_1, %c0_2] : memref<64x128xbf16, #tpu.memory_space<vmem>>, vector<64x128xbf16>
    %cst = arith.constant dense<0.000000e+00> : vector<16x128xf32>
    %3 = tpu.matmul %1, %2, %cst {dimension_numbers = #tpu.dot_dimension_numbers<[1], [0], [0], [1], [0, 0, 1, 1], [], []>} : vector<16x64xbf16>, vector<64x128xbf16>, vector<16x128xf32> -> vector<16x128xf32>
    %c0_3 = arith.constant 0 : index
    %c0_4 = arith.constant 0 : index
    %4 = vector.load %arg3[%c0_3, %c0_4] : memref<1x128xf32, #tpu.memory_space<vmem>>, vector<1x128xf32>
    %5 = vector.broadcast %4 : vector<1x128xf32> to vector<16x128xf32>
    %6 = arith.addf %3, %5 : vector<16x128xf32>
    %c0_5 = arith.constant 0 : index
    %c0_6 = arith.constant 0 : index
    %7 = vector.load %arg4[%c0_5, %c0_6] : memref<16x128xf32, #tpu.memory_space<vmem>>, vector<16x128xf32>
    tpu.vector_store %arg4[%c0_5, %c0_6], %6 {strides = array<i32>} : memref<16x128xf32, #tpu.memory_space<vmem>>, vector<16x128xf32>,
    return
  }
  func.func @transform_0(%arg0: i32) -> (i32, i32) {
    %c0_i32 = arith.constant 0 : i32
    %c0_i32_0 = arith.constant 0 : i32
    return %arg0, %c0_i32 : i32, i32
  }
  func.func @transform_1(%arg0: i32) -> (i32, i32) {
    %c0_i32 = arith.constant 0 : i32
    %c0_i32_0 = arith.constant 0 : i32
    %c0_i32_1 = arith.constant 0 : i32
    return %c0_i32, %c0_i32_0 : i32, i32
  }
  func.func @transform_2(%arg0: i32) -> (i32, i32) {
    %c0_i32 = arith.constant 0 : i32
    %c0_i32_0 = arith.constant 0 : i32
    %c0_i32_1 = arith.constant 0 : i32
    return %c0_i32, %c0_i32_0 : i32, i32
  }
  func.func @transform_3(%arg0: i32) -> (i32, i32) {
    %c0_i32 = arith.constant 0 : i32
    %c0_i32_0 = arith.constant 0 : i32
    return %arg0, %c0_i32 : i32, i32
  }
}

</mosaic_0001>

<llo_original>
// kernel: patch_projection.1
$region0: #{patch_projection.1}
  #allocation0 [shape = 'u32[]', space=smem, size = 0x4, offset = 0x4, fixed_abs, tag = 'smem constant byte address 0x4 - core index']
  #allocation1 [shape = 'u32[144,128]{1,0:T(1,128)}', space=vmem, size = 0x12000, scoped, tag = 'internal scratch']
  %s0 = inlined_call_operand.vmem [shape: f32[16,64], index: 0, kind: input, shape index: {}]
  %s1 = inlined_call_operand.vmem [shape: bf16[64,128], index: 1, kind: input, shape index: {}]
  %s2 = inlined_call_operand.vmem [shape: f32[1,128], index: 2, kind: input, shape index: {}]
  %s3 = inlined_call_operand.vmem [shape: f32[16,128], index: 3, kind: output, shape index: {}]
  %s4 = sld [smem:[#allocation0]]
  $region22: #{patch_projection.1} parent=0
    _
  %s6 = ssub.s32 1, %s4
  %s7 = scalar_select 0, %s6, %s4
  // Predicated region
  $region2: #{patch_projection.1} parent=0 // pred_check
    _
  $region3: #{patch_projection.1} parent=0 // pred_check_branch
    %9 = sbr.rel (0) target = $region5
  $region4: #{patch_projection.1} parent=0 // pred_region
    _
  $region5: #{patch_projection.1} parent=0 // pred_fallthru
    _
  // Predicated region
  $region6: #{patch_projection.1} parent=0 // pred_check
    _
  $region7: #{patch_projection.1} parent=0 // pred_check_branch
    %11 = sbr.rel (0) target = $region9
  $region8: #{patch_projection.1} parent=0 // pred_region
    _
  $region9: #{patch_projection.1} parent=0 // pred_fallthru
    _
  // Predicated region
  $region10: #{patch_projection.1} parent=0 // pred_check
    _
  $region11: #{patch_projection.1} parent=0 // pred_check_branch
    %13 = sbr.rel (0) target = $region13
  $region12: #{patch_projection.1} parent=0 // pred_region
    _
  $region13: #{patch_projection.1} parent=0 // pred_fallthru
    _
  %v15 = vld [vmem:[%s0] sm:$0xff]
  %v16 = vld [vmem:[%s0 + $0x8] sm:$0xff]
  %v17 = vpack.c.bf16 %v16, %v15
  %v18 = vld [vmem:[%s1] sm:$0xf]
  %v19 = vld [vmem:[%s1 + $0x4] sm:$0xf]
  %v20 = vld [vmem:[%s1 + $0x8] sm:$0xf]
  %v21 = vld [vmem:[%s1 + $0xc] sm:$0xf]
  %v22 = vld [vmem:[%s1 + $0x10] sm:$0xf]
  %v23 = vld [vmem:[%s1 + $0x14] sm:$0xf]
  %v24 = vld [vmem:[%s1 + $0x18] sm:$0xf]
  %v25 = vld [vmem:[%s1 + $0x1c] sm:$0xf]
  %v26 = vld [vmem:[%s2] sm:$0x1]
  %v28 = vlaneseq
  %v29 = vshrl.u32 %v28, 7
  %v30 = vsub.s32 0, %v29
  %v31 = vrot.slane %v26, %v30
  %v41 = vunpack.c.l.b16 %v18
  %v42 = vunpack.c.l.b16 %v19
  %v43 = vunpack.c.l.b16 %v20
  %v44 = vunpack.c.l.b16 %v21
  %v45 = vunpack.c.l.b16 %v22
  %v46 = vunpack.c.l.b16 %v23
  %v47 = vunpack.c.l.b16 %v24
  %v48 = vunpack.c.l.b16 %v25
  %v49 = vpack.c.b16 %v42, %v41
  %v50 = vpack.c.b16 %v44, %v43
  %v51 = vpack.c.b16 %v46, %v45
  %v52 = vpack.c.b16 %v48, %v47
  %vm57 = vcmask 523264
  %v59 = vsel %vm57, %v17, 0
  %61 = vmatprep.subr.bf16.mxu0 0
  %62 = vmatpush1.bf16.msra.mxu0 0
  %63 = vmatprep.subr.bf16.mxu0 0
  %64 = vmatpush1.bf16.msra.mxu0 0
  %65 = vmatprep.subr.bf16.mxu0 0
  %66 = vmatpush1.bf16.msra.mxu0 0
  %67 = vmatprep.subr.bf16.mxu0 0
  %68 = vmatpush1.bf16.msra.mxu0 0
  %69 = vmatprep.subr.bf16.mxu0 0
  %70 = vmatpush1.bf16.msra.mxu0 %v52
  %71 = vmatprep.subr.bf16.mxu0 0
  %72 = vmatpush1.bf16.msra.mxu0 %v51
  %73 = vmatprep.subr.bf16.mxu0 0
  %74 = vmatpush1.bf16.msra.mxu0 %v50
  %75 = vmatprep.subr.bf16.mxu0 0
  %76 = vmatpush1.bf16.msra.mxu0 %v49
  %77 = vmatprep.subr.bf16.mxu0 0
  %78 = vmatpush2.bf16.msra.mxu0 0
  %79 = vmatprep.subr.bf16.mxu0 0
  %80 = vmatpush2.bf16.msra.mxu0 0
  %81 = vmatprep.subr.bf16.mxu0 0
  %82 = vmatpush2.bf16.msra.mxu0 0
  %83 = vmatprep.subr.bf16.mxu0 0
  %84 = vmatpush2.bf16.msra.mxu0 0
  %85 = vmatprep.subr.bf16.mxu0 0
  %86 = vmatpush2.bf16.msra.mxu0 0
  %87 = vmatprep.subr.bf16.mxu0 0
  %88 = vmatpush2.bf16.msra.mxu0 0
  %89 = vmatprep.subr.bf16.mxu0 0
  %90 = vmatpush2.bf16.msra.mxu0 0
  %91 = vmatprep.subr.bf16.mxu0 0
  %92 = vmatpush2.bf16.msra.mxu0 0
  %93 = vmatprep.mubr.bf16.mxu0 0
  %94 = vmatmul.mubr.bf16.gmra.mxu0 %v59
  %v95 = vpop.f32.mrf.mxu0
  %v96 = vadd.f32 %v31, %v95
  %v97 = vpop.f32.mrf.mxu0
  %v98 = vpop.f32.mrf.mxu0
  %v99 = vadd.f32 %v31, %v98
  %v100 = vpop.f32.mrf.mxu0
  %101 = vdwg.mxu0
  %102 = vst [vmem:[%s3] sm:$0xff] %v96
  %103 = vst [vmem:[%s3 + $0x8] sm:$0xff] %v99
  // Predicated region
  $region14: #{patch_projection.1} parent=0 // pred_check
    _
  $region15: #{patch_projection.1} parent=0 // pred_check_branch
    %105 = sbr.rel (0) target = $region17
  $region16: #{patch_projection.1} parent=0 // pred_region
    _
  $region17: #{patch_projection.1} parent=0 // pred_fallthru
    _
  // Predicated region
  $region18: #{patch_projection.1} parent=0 // pred_check
    _
  $region19: #{patch_projection.1} parent=0 // pred_check_branch
    %107 = sbr.rel (0) target = $region21
  $region20: #{patch_projection.1} parent=0 // pred_region
    _
  $region21: #{patch_projection.1} parent=0 // pred_fallthru
    _

</llo_original>
